<compile_context>
chip_gen: v7x
topology: tpu7x:2x2x1
jax: 0.10.0
libtpu: 0.0.40
codegen_flags: <defaults>
</compile_context>

<pallas_src>
import jax
import jax.numpy as jnp
from jax.experimental import pallas as pl
from jax.experimental.pallas import tpu as pltpu

BN_EPS = 1e-5
LANE = 128  # pad every feature dim to a full vreg lane width


def _mlp_kernel(x_ref, w_ref, p_ref, out_ref):
    x = x_ref[...]
    inv_b = 1.0 / x_ref.shape[0]  # static; batch rows are never zero-padded

    p = p_ref[...]
    g1, be1 = p[0:1, :], p[1:2, :]
    g2, be2 = p[2:3, :], p[3:4, :]
    b3 = p[4:5, :]

    # ---- fc1 (bias cancels under BN) + bn1 + relu ----
    h = jnp.dot(x, w_ref[0], preferred_element_type=jnp.float32)
    s1 = jnp.sum(h, axis=0, keepdims=True)        # independent XLU reduces
    s2 = jnp.sum(h * h, axis=0, keepdims=True)
    mean = s1 * inv_b
    var = s2 * inv_b - mean * mean                # biased variance (training mode)
    scale = g1 * jax.lax.rsqrt(var + BN_EPS)
    h = jnp.maximum(h * scale + (be1 - mean * scale), 0.0)

    # ---- fc2 (bias cancels under BN) + bn2 + relu ----
    h = jnp.dot(h, w_ref[1], preferred_element_type=jnp.float32)
    s1 = jnp.sum(h, axis=0, keepdims=True)
    s2 = jnp.sum(h * h, axis=0, keepdims=True)
    mean = s1 * inv_b
    var = s2 * inv_b - mean * mean
    scale = g2 * jax.lax.rsqrt(var + BN_EPS)
    h = jnp.maximum(h * scale + (be2 - mean * scale), 0.0)

    # ---- fc3 ----
    out = jnp.dot(h, w_ref[2], preferred_element_type=jnp.float32) + b3
    out_ref[...] = out.astype(out_ref.dtype)


def _pad2d(a, rows, cols):
    out = jnp.zeros((rows, cols), jnp.float32)
    return out.at[: a.shape[0], : a.shape[1]].set(a.astype(jnp.float32))


def pack_params(p, input_size, hidden_size_1, hidden_size_2, output_size):
    """Zero-pad all feature dims to LANE, stack weights, pack BN/bias vectors.

    fc1/fc2 biases are intentionally NOT packed: a per-column constant added
    before BatchNorm cancels exactly against the batch mean.  Padded lanes
    carry gamma=0, beta=0 and zero weight columns/rows, so they stay exactly 0.
    """
    del input_size, hidden_size_1, hidden_size_2  # implied by array shapes

    w_all = jnp.stack(
        [_pad2d(p["w1"], LANE, LANE),
         _pad2d(p["w2"], LANE, LANE),
         _pad2d(p["w3"], LANE, LANE)], axis=0)     # (3, 128, 128)

    p_all = jnp.zeros((8, LANE), jnp.float32)
    p_all = p_all.at[0, : p["g1"].shape[1]].set(p["g1"][0])
    p_all = p_all.at[1, : p["be1"].shape[1]].set(p["be1"][0])
    p_all = p_all.at[2, : p["g2"].shape[1]].set(p["g2"][0])
    p_all = p_all.at[3, : p["be2"].shape[1]].set(p["be2"][0])
    p_all = p_all.at[4, : p["b3"].shape[1]].set(p["b3"][0])

    return {"w": w_all, "p": p_all, "output_size": output_size}


def generative_model_forward(x, packed):
    """x: (batch, input_size) f32.  packed: output of pack_params."""
    batch = x.shape[0]
    output_size = packed["output_size"]
    w_all, p_all = packed["w"], packed["p"]

    x_pad = _pad2d(x, batch, LANE)

    flops = 2 * batch * LANE * LANE * 3 + 12 * batch * LANE  # matmuls + BN/ReLU
    bytes_accessed = int(x_pad.size + w_all.size + p_all.size + batch * LANE) * 4
    # x + 3 weights + params + out + live activations/temps, with headroom;
    # capped at v7x's 64 MiB physical VMEM (beyond that, BN must go two-pass).
    vmem_bytes = int(w_all.size + p_all.size + 10 * batch * LANE) * 4 + (2 << 20)
    vmem_bytes = min(max(vmem_bytes, 4 << 20), 64 << 20)

    out_pad = pl.pallas_call(
        _mlp_kernel,
        out_shape=jax.ShapeDtypeStruct((batch, LANE), jnp.float32),
        # Small model: everything fits in one gridless block resident in VMEM.
        # (Whole-batch block is also required for BN-over-batch correctness.)
        in_specs=[pl.BlockSpec(memory_space=pltpu.MemorySpace.VMEM)] * 3,
        out_specs=pl.BlockSpec(memory_space=pltpu.MemorySpace.VMEM),
        compiler_params=pltpu.CompilerParams(vmem_limit_bytes=vmem_bytes),
        cost_estimate=pl.CostEstimate(flops=flops, transcendentals=2 * LANE,
                                      bytes_accessed=bytes_accessed),
    )(x_pad, w_all, p_all)

    return out_pad[:, :output_size]


def init_params(key, input_size, hidden_size_1, hidden_size_2, output_size):
    """PyTorch nn.Linear-style init (U(-1/sqrt(in), 1/sqrt(in))), weights stored (in, out)."""
    def linear(key, fan_in, fan_out):
        kw, kb = jax.random.split(key)
        bound = 1.0 / jnp.sqrt(fan_in)
        w = jax.random.uniform(kw, (fan_in, fan_out), jnp.float32, -bound, bound)
        b = jax.random.uniform(kb, (1, fan_out), jnp.float32, -bound, bound)
        return w, b

    k1, k2, k3 = jax.random.split(key, 3)
    w1, b1 = linear(k1, input_size, hidden_size_1)
    w2, b2 = linear(k2, hidden_size_1, hidden_size_2)
    w3, b3 = linear(k3, hidden_size_2, output_size)

    return {
        "w1": w1, "b1": b1,
        "g1": jnp.ones((1, hidden_size_1), jnp.float32),
        "be1": jnp.zeros((1, hidden_size_1), jnp.float32),
        "w2": w2, "b2": b2,
        "g2": jnp.ones((1, hidden_size_2), jnp.float32),
        "be2": jnp.zeros((1, hidden_size_2), jnp.float32),
        "w3": w3, "b3": b3,
    }


def _reference_forward(x, p):
    """Pure-JAX reference (unpadded, with biases) matching PyTorch semantics."""
    h = x @ p["w1"] + p["b1"]
    m = h.mean(0, keepdims=True)
    v = ((h - m) ** 2).mean(0, keepdims=True)
    h = jnp.maximum((h - m) / jnp.sqrt(v + BN_EPS) * p["g1"] + p["be1"], 0.0)
    h = h @ p["w2"] + p["b2"]
    m = h.mean(0, keepdims=True)
    v = ((h - m) ** 2).mean(0, keepdims=True)
    h = jnp.maximum((h - m) / jnp.sqrt(v + BN_EPS) * p["g2"] + p["be2"], 0.0)
    return h @ p["w3"] + p["b3"]


if __name__ == "__main__":
    # Small shapes consistent with the module's forward:
    batch, input_size = 8, 16
    hidden_size_1, hidden_size_2, output_size = 32, 32, 16

    key = jax.random.PRNGKey(0)
    kx, kp = jax.random.split(key)
    x = jax.random.normal(kx, (batch, input_size), jnp.float32)
    params = init_params(kp, input_size, hidden_size_1, hidden_size_2, output_size)
    packed = pack_params(params, input_size, hidden_size_1, hidden_size_2, output_size)

    out = generative_model_forward(x, packed)
    out = jax.block_until_ready(out)

    ref = _reference_forward(x, params)
    assert out.shape == (batch, output_size), out.shape
    assert jnp.allclose(out, ref, atol=1e-4, rtol=1e-4), "mismatch vs reference"

    print("KERNEL_OK")
</pallas_src>

<mosaic_0001>
module attributes {stable_mosaic.version = 11 : i64} {
  func.func @_mlp_kernel(%arg0: memref<8x128xf32, #tpu.memory_space<vmem>>, %arg1: memref<3x128x128xf32, #tpu.memory_space<vmem>>, %arg2: memref<8x128xf32, #tpu.memory_space<vmem>>, %arg3: memref<8x128xf32, #tpu.memory_space<vmem>>) attributes {dimension_semantics = [], scalar_prefetch = 0 : i64, scratch_operands = 0 : i64, tpu.core_type = #tpu.core_type<tc>} {
    %c0 = arith.constant 0 : index
    %c0_0 = arith.constant 0 : index
    %0 = vector.load %arg0[%c0, %c0_0] : memref<8x128xf32, #tpu.memory_space<vmem>>, vector<8x128xf32>
    %c0_1 = arith.constant 0 : index
    %c0_2 = arith.constant 0 : index
    %1 = vector.load %arg2[%c0_1, %c0_2] : memref<8x128xf32, #tpu.memory_space<vmem>>, vector<8x128xf32>
    %2 = vector.extract_strided_slice %1 {offsets = [0, 0], sizes = [1, 128], strides = [1, 1]} : vector<8x128xf32> to vector<1x128xf32>
    %3 = vector.extract_strided_slice %1 {offsets = [1, 0], sizes = [1, 128], strides = [1, 1]} : vector<8x128xf32> to vector<1x128xf32>
    %4 = vector.extract_strided_slice %1 {offsets = [2, 0], sizes = [1, 128], strides = [1, 1]} : vector<8x128xf32> to vector<1x128xf32>
    %5 = vector.extract_strided_slice %1 {offsets = [3, 0], sizes = [1, 128], strides = [1, 1]} : vector<8x128xf32> to vector<1x128xf32>
    %6 = vector.extract_strided_slice %1 {offsets = [4, 0], sizes = [1, 128], strides = [1, 1]} : vector<8x128xf32> to vector<1x128xf32>
    %c0_3 = arith.constant 0 : index
    %c0_4 = arith.constant 0 : index
    %c0_5 = arith.constant 0 : index
    %7 = vector.load %arg1[%c0_3, %c0_4, %c0_5] : memref<3x128x128xf32, #tpu.memory_space<vmem>>, vector<1x128x128xf32>
    %8 = vector.shape_cast %7 : vector<1x128x128xf32> to vector<128x128xf32>
    %cst = arith.constant dense<0.000000e+00> : vector<8x128xf32>
    %9 = tpu.matmul %0, %8, %cst {dimension_numbers = #tpu.dot_dimension_numbers<[1], [0], [0], [1], [0, 0, 1, 1], [], []>} : vector<8x128xf32>, vector<128x128xf32>, vector<8x128xf32> -> vector<8x128xf32>
    %cst_6 = arith.constant dense<0.000000e+00> : vector<128xf32>
    %10 = vector.multi_reduction <add>, %9, %cst_6 [0] : vector<8x128xf32> to vector<128xf32>
    %11 = vector.shape_cast %10 : vector<128xf32> to vector<1x128xf32>
    %12 = arith.mulf %9, %9 : vector<8x128xf32>
    %cst_7 = arith.constant dense<0.000000e+00> : vector<128xf32>
    %13 = vector.multi_reduction <add>, %12, %cst_7 [0] : vector<8x128xf32> to vector<128xf32>
    %14 = vector.shape_cast %13 : vector<128xf32> to vector<1x128xf32>
    %cst_8 = arith.constant 1.250000e-01 : f32
    %15 = vector.broadcast %cst_8 : f32 to vector<1x128xf32>
    %16 = arith.mulf %11, %15 : vector<1x128xf32>
    %cst_9 = arith.constant 1.250000e-01 : f32
    %17 = vector.broadcast %cst_9 : f32 to vector<1x128xf32>
    %18 = arith.mulf %14, %17 : vector<1x128xf32>
    %19 = arith.mulf %16, %16 : vector<1x128xf32>
    %20 = arith.subf %18, %19 : vector<1x128xf32>
    %cst_10 = arith.constant 9.99999974E-6 : f32
    %21 = vector.broadcast %cst_10 : f32 to vector<1x128xf32>
    %22 = arith.addf %20, %21 : vector<1x128xf32>
    %23 = math.rsqrt %22 : vector<1x128xf32>
    %24 = arith.mulf %2, %23 : vector<1x128xf32>
    %25 = vector.broadcast %24 : vector<1x128xf32> to vector<8x128xf32>
    %26 = arith.mulf %9, %25 : vector<8x128xf32>
    %27 = arith.mulf %16, %24 : vector<1x128xf32>
    %28 = arith.subf %3, %27 : vector<1x128xf32>
    %29 = vector.broadcast %28 : vector<1x128xf32> to vector<8x128xf32>
    %30 = arith.addf %26, %29 : vector<8x128xf32>
    %cst_11 = arith.constant 0.000000e+00 : f32
    %31 = vector.broadcast %cst_11 : f32 to vector<8x128xf32>
    %32 = arith.maximumf %30, %31 : vector<8x128xf32>
    %c1 = arith.constant 1 : index
    %c0_12 = arith.constant 0 : index
    %c0_13 = arith.constant 0 : index
    %33 = vector.load %arg1[%c1, %c0_12, %c0_13] : memref<3x128x128xf32, #tpu.memory_space<vmem>>, vector<1x128x128xf32>
    %34 = vector.shape_cast %33 : vector<1x128x128xf32> to vector<128x128xf32>
    %cst_14 = arith.constant dense<0.000000e+00> : vector<8x128xf32>
    %35 = tpu.matmul %32, %34, %cst_14 {dimension_numbers = #tpu.dot_dimension_numbers<[1], [0], [0], [1], [0, 0, 1, 1], [], []>} : vector<8x128xf32>, vector<128x128xf32>, vector<8x128xf32> -> vector<8x128xf32>
    %cst_15 = arith.constant dense<0.000000e+00> : vector<128xf32>
    %36 = vector.multi_reduction <add>, %35, %cst_15 [0] : vector<8x128xf32> to vector<128xf32>
    %37 = vector.shape_cast %36 : vector<128xf32> to vector<1x128xf32>
    %38 = arith.mulf %35, %35 : vector<8x128xf32>
    %cst_16 = arith.constant dense<0.000000e+00> : vector<128xf32>
    %39 = vector.multi_reduction <add>, %38, %cst_16 [0] : vector<8x128xf32> to vector<128xf32>
    %40 = vector.shape_cast %39 : vector<128xf32> to vector<1x128xf32>
    %cst_17 = arith.constant 1.250000e-01 : f32
    %41 = vector.broadcast %cst_17 : f32 to vector<1x128xf32>
    %42 = arith.mulf %37, %41 : vector<1x128xf32>
    %cst_18 = arith.constant 1.250000e-01 : f32
    %43 = vector.broadcast %cst_18 : f32 to vector<1x128xf32>
    %44 = arith.mulf %40, %43 : vector<1x128xf32>
    %45 = arith.mulf %42, %42 : vector<1x128xf32>
    %46 = arith.subf %44, %45 : vector<1x128xf32>
    %cst_19 = arith.constant 9.99999974E-6 : f32
    %47 = vector.broadcast %cst_19 : f32 to vector<1x128xf32>
    %48 = arith.addf %46, %47 : vector<1x128xf32>
    %49 = math.rsqrt %48 : vector<1x128xf32>
    %50 = arith.mulf %4, %49 : vector<1x128xf32>
    %51 = vector.broadcast %50 : vector<1x128xf32> to vector<8x128xf32>
    %52 = arith.mulf %35, %51 : vector<8x128xf32>
    %53 = arith.mulf %42, %50 : vector<1x128xf32>
    %54 = arith.subf %5, %53 : vector<1x128xf32>
    %55 = vector.broadcast %54 : vector<1x128xf32> to vector<8x128xf32>
    %56 = arith.addf %52, %55 : vector<8x128xf32>
    %cst_20 = arith.constant 0.000000e+00 : f32
    %57 = vector.broadcast %cst_20 : f32 to vector<8x128xf32>
    %58 = arith.maximumf %56, %57 : vector<8x128xf32>
    %c2 = arith.constant 2 : index
    %c0_21 = arith.constant 0 : index
    %c0_22 = arith.constant 0 : index
    %59 = vector.load %arg1[%c2, %c0_21, %c0_22] : memref<3x128x128xf32, #tpu.memory_space<vmem>>, vector<1x128x128xf32>
    %60 = vector.shape_cast %59 : vector<1x128x128xf32> to vector<128x128xf32>
    %cst_23 = arith.constant dense<0.000000e+00> : vector<8x128xf32>
    %61 = tpu.matmul %58, %60, %cst_23 {dimension_numbers = #tpu.dot_dimension_numbers<[1], [0], [0], [1], [0, 0, 1, 1], [], []>} : vector<8x128xf32>, vector<128x128xf32>, vector<8x128xf32> -> vector<8x128xf32>
    %62 = vector.broadcast %6 : vector<1x128xf32> to vector<8x128xf32>
    %63 = arith.addf %61, %62 : vector<8x128xf32>
    %c0_24 = arith.constant 0 : index
    %c0_25 = arith.constant 0 : index
    %64 = vector.load %arg3[%c0_24, %c0_25] : memref<8x128xf32, #tpu.memory_space<vmem>>, vector<8x128xf32>
    tpu.vector_store %arg3[%c0_24, %c0_25], %63 {strides = array<i32>} : memref<8x128xf32, #tpu.memory_space<vmem>>, vector<8x128xf32>,
    return
  }
}

</mosaic_0001>

<llo_original>
// kernel: tpu_custom_call.1
$region0: #{tpu_custom_call.1}
  #allocation0 [shape = 'u32[]', space=smem, size = 0x4, offset = 0x4, fixed_abs, tag = 'smem constant byte address 0x4 - core index']
  #allocation1 [shape = 'u32[144,128]{1,0:T(1,128)}', space=vmem, size = 0x12000, scoped, tag = 'internal scratch']
  %s0 = inlined_call_operand.hbm [shape: f32[8,128], index: 0, kind: input, shape index: {}]
  %s1 = inlined_call_operand.hbm [shape: f32[3,128,128], index: 1, kind: input, shape index: {}]
  %s2 = inlined_call_operand.hbm [shape: f32[8,128], index: 2, kind: input, shape index: {}]
  %s3 = inlined_call_operand.hbm [shape: f32[8,128], index: 3, kind: output, shape index: {}]
  %s4 = sld [smem:[#allocation0]]
  $region34: #{tpu_custom_call.1} parent=0
    _
  %s6 = ssub.s32 1, %s4
  %s7 = scalar_select 0, %s6, %s4
  $region1: #{tpu_custom_call.1} parent=0
    #allocation2 [shape = 'u8[4096]{0}', space=vmem, size = 0x1000, scoped, tag = 'input window, operand 0, single buffered']
    #allocation3 [shape = 's32[1]{0}', space=sflag, size = 0x4, scoped, tag = 'scoped memory for tpu_custom_call.1']
    #allocation4 [shape = 's32[1]{0}', space=sflag, size = 0x4, scoped, tag = 'scoped memory for tpu_custom_call.1']
    #allocation5 [shape = 'u8[196608]{0}', space=vmem, size = 0x30000, scoped, tag = 'input window, operand 1, single buffered']
    #allocation6 [shape = 's32[1]{0}', space=sflag, size = 0x4, scoped, tag = 'scoped memory for tpu_custom_call.1']
    #allocation7 [shape = 'u8[4096]{0}', space=vmem, size = 0x1000, scoped, tag = 'input window, operand 2, single buffered']
    #allocation8 [shape = 'u8[4096]{0}', space=vmem, size = 0x1000, scoped, tag = 'output window, operand 0, single buffered']
    %8 = vsyncpa [#allocation3], 0
    %9 = vsyncpa [#allocation6], 0
    %10 = vsyncpa [#allocation4], 0
    // Predicated region
    $region2: #{tpu_custom_call.1} parent=1 // pred_check
      _
    $region3: #{tpu_custom_call.1} parent=1 // pred_check_branch
      %12 = sbr.rel (0) target = $region5
    $region4: #{tpu_custom_call.1} parent=1 // pred_region
      %s14 = ssub.s32 128, 128
      %15 = vsyncadd [#allocation3], %s14
      %s17 = sshll.u32 [#allocation2], 4
      %s18 = int_to_ptr.vmem [resolvable:$true] %s17
      %20 = dma.hbm_to_vmem [thread:$0]  %s0, 128, %s18, [#allocation3]
    $region5: #{tpu_custom_call.1} parent=1 // pred_fallthru
      _
    // Predicated region
    $region6: #{tpu_custom_call.1} parent=1 // pred_check
      _
    $region7: #{tpu_custom_call.1} parent=1 // pred_check_branch
      %22 = sbr.rel (0) target = $region9
    $region8: #{tpu_custom_call.1} parent=1 // pred_region
      %s24 = ssub.s32 6144, 6144
      %25 = vsyncadd [#allocation6], %s24
      %s26 = sshll.u32 [#allocation5], 4
      %s27 = int_to_ptr.vmem [resolvable:$true] %s26
      %32 = dma.hbm_to_vmem [thread:$0]  %s1, 6144, %s27, [#allocation6], 128, 128, 8
    $region9: #{tpu_custom_call.1} parent=1 // pred_fallthru
      _
    // Predicated region
    $region10: #{tpu_custom_call.1} parent=1 // pred_check
      _
    $region11: #{tpu_custom_call.1} parent=1 // pred_check_branch
      %34 = sbr.rel (0) target = $region13
    $region12: #{tpu_custom_call.1} parent=1 // pred_region
      %s36 = ssub.s32 128, 128
      %37 = vsyncadd [#allocation6], %s36
      %s39 = sshll.u32 [#allocation7], 4
      %s40 = int_to_ptr.vmem [resolvable:$true] %s39
      %42 = dma.hbm_to_vmem [thread:$0]  %s2, 128, %s40, [#allocation6]
    $region13: #{tpu_custom_call.1} parent=1 // pred_fallthru
      _
    // Predicated region
    $region14: #{tpu_custom_call.1} parent=1 // pred_check
      _
    $region15: #{tpu_custom_call.1} parent=1 // pred_check_branch
      %44 = sbr.rel (0) target = $region17
    $region16: #{tpu_custom_call.1} parent=1 // pred_region
      %45 = dma.done [#allocation3], 128
    $region17: #{tpu_custom_call.1} parent=1 // pred_fallthru
      _
    // Predicated region
    $region18: #{tpu_custom_call.1} parent=1 // pred_check
      _
    $region19: #{tpu_custom_call.1} parent=1 // pred_check_branch
      %47 = sbr.rel (0) target = $region21
    $region20: #{tpu_custom_call.1} parent=1 // pred_region
      %48 = dma.done [#allocation6], 6144
    $region21: #{tpu_custom_call.1} parent=1 // pred_fallthru
      _
    // Predicated region
    $region22: #{tpu_custom_call.1} parent=1 // pred_check
      _
    $region23: #{tpu_custom_call.1} parent=1 // pred_check_branch
      %50 = sbr.rel (0) target = $region25
    $region24: #{tpu_custom_call.1} parent=1 // pred_region
      %51 = dma.done [#allocation6], 128
    $region25: #{tpu_custom_call.1} parent=1 // pred_fallthru
      _
    %v52 = vld [vmem:[#allocation2] sm:$0xff]
    %v53 = vld [vmem:[#allocation7] sm:$0xff]
    %v54 = vld [vmem:[#allocation5] sm:$0xff]
    %v55 = vld [vmem:[#allocation5 + $0x8] sm:$0xff]
    %v56 = vld [vmem:[#allocation5 + $0x10] sm:$0xff]
    %v57 = vld [vmem:[#allocation5 + $0x18] sm:$0xff]
    %v58 = vld [vmem:[#allocation5 + $0x20] sm:$0xff]
    %v59 = vld [vmem:[#allocation5 + $0x28] sm:$0xff]
    %v60 = vld [vmem:[#allocation5 + $0x30] sm:$0xff]
    %v61 = vld [vmem:[#allocation5 + $0x38] sm:$0xff]
    %v62 = vld [vmem:[#allocation5 + $0x40] sm:$0xff]
    %v63 = vld [vmem:[#allocation5 + $0x48] sm:$0xff]
    %v64 = vld [vmem:[#allocation5 + $0x50] sm:$0xff]
    %v65 = vld [vmem:[#allocation5 + $0x58] sm:$0xff]
    %v66 = vld [vmem:[#allocation5 + $0x60] sm:$0xff]
    %v67 = vld [vmem:[#allocation5 + $0x68] sm:$0xff]
    %v68 = vld [vmem:[#allocation5 + $0x70] sm:$0xff]
    %v69 = vld [vmem:[#allocation5 + $0x78] sm:$0xff]
    %70 = vmatprep.subr.mxu0 0.0
    %71 = vmatpush1.msra.mxu0 %v54
    %72 = vmatprep.subr.mxu0 0.0
    %73 = vmatpush1.msra.mxu0 %v55
    %74 = vmatprep.subr.mxu0 0.0
    %75 = vmatpush1.msra.mxu0 %v56
    %76 = vmatprep.subr.mxu0 0.0
    %77 = vmatpush1.msra.mxu0 %v57
    %78 = vmatprep.subr.mxu0 0.0
    %79 = vmatpush1.msra.mxu0 %v58
    %80 = vmatprep.subr.mxu0 0.0
    %81 = vmatpush1.msra.mxu0 %v59
    %82 = vmatprep.subr.mxu0 0.0
    %83 = vmatpush1.msra.mxu0 %v60
    %84 = vmatprep.subr.mxu0 0.0
    %85 = vmatpush1.msra.mxu0 %v61
    %86 = vmatprep.subr.mxu0 0.0
    %87 = vmatpush1.msra.mxu0 %v62
    %88 = vmatprep.subr.mxu0 0.0
    %89 = vmatpush1.msra.mxu0 %v63
    %90 = vmatprep.subr.mxu0 0.0
    %91 = vmatpush1.msra.mxu0 %v64
    %92 = vmatprep.subr.mxu0 0.0
    %93 = vmatpush1.msra.mxu0 %v65
    %94 = vmatprep.subr.mxu0 0.0
    %95 = vmatpush1.msra.mxu0 %v66
    %96 = vmatprep.subr.mxu0 0.0
    %97 = vmatpush1.msra.mxu0 %v67
    %98 = vmatprep.subr.mxu0 0.0
    %99 = vmatpush1.msra.mxu0 %v68
    %100 = vmatprep.subr.mxu0 0.0
    %101 = vmatpush1.msra.mxu0 %v69
    %102 = vmatprep.subr.mxu0 0.0
    %103 = vmatpush1.msra.mxu0 0.0
    %104 = vmatprep.subr.mxu0 0.0
    %105 = vmatpush1.msra.mxu0 0.0
    %106 = vmatprep.subr.mxu0 0.0
    %107 = vmatpush1.msra.mxu0 0.0
    %108 = vmatprep.subr.mxu0 0.0
    %109 = vmatpush1.msra.mxu0 0.0
    %110 = vmatprep.subr.mxu0 0.0
    %111 = vmatpush1.msra.mxu0 0.0
    %112 = vmatprep.subr.mxu0 0.0
    %113 = vmatpush1.msra.mxu0 0.0
    %114 = vmatprep.subr.mxu0 0.0
    %115 = vmatpush1.msra.mxu0 0.0
    %116 = vmatprep.subr.mxu0 0.0
    %117 = vmatpush1.msra.mxu0 0.0
    %118 = vmatprep.subr.mxu0 0.0
    %119 = vmatpush1.msra.mxu0 0.0
    %120 = vmatprep.subr.mxu0 0.0
    %121 = vmatpush1.msra.mxu0 0.0
    %122 = vmatprep.subr.mxu0 0.0
    %123 = vmatpush1.msra.mxu0 0.0
    %124 = vmatprep.subr.mxu0 0.0
    %125 = vmatpush1.msra.mxu0 0.0
    %126 = vmatprep.subr.mxu0 0.0
    %127 = vmatpush1.msra.mxu0 0.0
    %128 = vmatprep.subr.mxu0 0.0
    %129 = vmatpush1.msra.mxu0 0.0
    %130 = vmatprep.subr.mxu0 0.0
    %131 = vmatpush1.msra.mxu0 0.0
    %132 = vmatprep.subr.mxu0 0.0
    %133 = vmatpush1.msra.mxu0 0.0
    %134 = vmatprep.mubr.f32.mxu0 0.0
    %135 = vmatmul.mubr.f32.gmra.mrb[0].mxu0 %v52
    %v136 = vpop.f32.mrb[0].mxu0
    %v137 = vadd.f32 0.0, %v136
    %v138 = vpop.f32.mrb[0].mxu0
    %139 = vdwg.mxu0
    %v140 = vrot.slane %v137, 4
    %v141 = vadd.f32 %v137, %v140
    %v142 = vrot.slane %v141, 2
    %v143 = vadd.f32 %v141, %v142
    %v144 = vrot.slane %v143, 1
    %v145 = vadd.f32 %v143, %v144
    %v146 = vmul.f32 %v137, %v137
    %v147 = vrot.slane %v146, 4
    %v148 = vadd.f32 %v146, %v147
    %v149 = vrot.slane %v148, 2
    %v150 = vadd.f32 %v148, %v149
    %v151 = vrot.slane %v150, 1
    %v152 = vadd.f32 %v150, %v151
    %v153 = vmul.f32 %v145, 0.125
    %v154 = vmul.f32 %v152, 0.125
    %v155 = vmul.f32 %v153, %v153
    %v156 = vsub.f32 %v154, %v155
    %v157 = vadd.f32 %v156, 1e-05
    %v158 = vrsqrt.pop %v157
    %v159 = vmul.f32 %v53, %v158
    %v160 = vlaneseq
    %v161 = vshrl.u32 %v160, 7
    %v162 = vsub.s32 0, %v161
    %v163 = vrot.slane %v159, %v162
    %v164 = vmul.f32 %v137, %v163
    %v165 = vmul.f32 %v153, %v159
    %v167 = vrot.slane %v165, 7
    %v169 = vsub.f32 %v53, %v167
    %v170 = vlaneseq
    %v171 = vshrl.u32 %v170, 7
    %v172 = vsub.s32 1, %v171
    %v173 = vrot.slane %v169, %v172
    %v174 = vadd.f32 %v164, %v173
    %v175 = vmax.f32 %v174, 0.0
    %s176 = scalar_lea.vmem [#allocation5], 128
    %v177 = vld [vmem:[%s176] sm:$0xff]
    %v178 = vld [vmem:[%s176 + $0x8] sm:$0xff]
    %v179 = vld [vmem:[%s176 + $0x10] sm:$0xff]
    %v180 = vld [vmem:[%s176 + $0x18] sm:$0xff]
    %v181 = vld [vmem:[%s176 + $0x20] sm:$0xff]
    %v182 = vld [vmem:[%s176 + $0x28] sm:$0xff]
    %v183 = vld [vmem:[%s176 + $0x30] sm:$0xff]
    %v184 = vld [vmem:[%s176 + $0x38] sm:$0xff]
    %v185 = vld [vmem:[%s176 + $0x40] sm:$0xff]
    %v186 = vld [vmem:[%s176 + $0x48] sm:$0xff]
    %v187 = vld [vmem:[%s176 + $0x50] sm:$0xff]
    %v188 = vld [vmem:[%s176 + $0x58] sm:$0xff]
    %v189 = vld [vmem:[%s176 + $0x60] sm:$0xff]
    %v190 = vld [vmem:[%s176 + $0x68] sm:$0xff]
    %v191 = vld [vmem:[%s176 + $0x70] sm:$0xff]
    %v192 = vld [vmem:[%s176 + $0x78] sm:$0xff]
    %193 = vmatprep.subr.mxu0 0.0
    %194 = vmatpush1.msra.mxu0 %v177
    %195 = vmatprep.subr.mxu0 0.0
    %196 = vmatpush1.msra.mxu0 %v178
    %197 = vmatprep.subr.mxu0 0.0
    %198 = vmatpush1.msra.mxu0 %v179
    %199 = vmatprep.subr.mxu0 0.0
    %200 = vmatpush1.msra.mxu0 %v180
    %201 = vmatprep.subr.mxu0 0.0
    %202 = vmatpush1.msra.mxu0 %v181
    %203 = vmatprep.subr.mxu0 0.0
    %204 = vmatpush1.msra.mxu0 %v182
    %205 = vmatprep.subr.mxu0 0.0
    %206 = vmatpush1.msra.mxu0 %v183
    %207 = vmatprep.subr.mxu0 0.0
    %208 = vmatpush1.msra.mxu0 %v184
    %209 = vmatprep.subr.mxu0 0.0
    %210 = vmatpush1.msra.mxu0 %v185
    %211 = vmatprep.subr.mxu0 0.0
    %212 = vmatpush1.msra.mxu0 %v186
    %213 = vmatprep.subr.mxu0 0.0
    %214 = vmatpush1.msra.mxu0 %v187
    %215 = vmatprep.subr.mxu0 0.0
    %216 = vmatpush1.msra.mxu0 %v188
    %217 = vmatprep.subr.mxu0 0.0
    %218 = vmatpush1.msra.mxu0 %v189
    %219 = vmatprep.subr.mxu0 0.0
    %220 = vmatpush1.msra.mxu0 %v190
    %221 = vmatprep.subr.mxu0 0.0
    %222 = vmatpush1.msra.mxu0 %v191
    %223 = vmatprep.subr.mxu0 0.0
    %224 = vmatpush1.msra.mxu0 %v192
    %225 = vmatprep.subr.mxu0 0.0
    %226 = vmatpush1.msra.mxu0 0.0
    %227 = vmatprep.subr.mxu0 0.0
    %228 = vmatpush1.msra.mxu0 0.0
    %229 = vmatprep.subr.mxu0 0.0
    %230 = vmatpush1.msra.mxu0 0.0
    %231 = vmatprep.subr.mxu0 0.0
    %232 = vmatpush1.msra.mxu0 0.0
    %233 = vmatprep.subr.mxu0 0.0
    %234 = vmatpush1.msra.mxu0 0.0
    %235 = vmatprep.subr.mxu0 0.0
    %236 = vmatpush1.msra.mxu0 0.0
    %237 = vmatprep.subr.mxu0 0.0
    %238 = vmatpush1.msra.mxu0 0.0
    %239 = vmatprep.subr.mxu0 0.0
    %240 = vmatpush1.msra.mxu0 0.0
    %241 = vmatprep.subr.mxu0 0.0
    %242 = vmatpush1.msra.mxu0 0.0
    %243 = vmatprep.subr.mxu0 0.0
    %244 = vmatpush1.msra.mxu0 0.0
    %245 = vmatprep.subr.mxu0 0.0
    %246 = vmatpush1.msra.mxu0 0.0
    %247 = vmatprep.subr.mxu0 0.0
    %248 = vmatpush1.msra.mxu0 0.0
    %249 = vmatprep.subr.mxu0 0.0
    %250 = vmatpush1.msra.mxu0 0.0
    %251 = vmatprep.subr.mxu0 0.0
    %252 = vmatpush1.msra.mxu0 0.0
    %253 = vmatprep.subr.mxu0 0.0
    %254 = vmatpush1.msra.mxu0 0.0
    %255 = vmatprep.subr.mxu0 0.0
    %256 = vmatpush1.msra.mxu0 0.0
    %257 = vmatprep.mubr.f32.mxu0 0.0
    %258 = vmatmul.mubr.f32.gmra.mrb[0].mxu0 %v175
    %v259 = vpop.f32.mrb[0].mxu0
    %v260 = vadd.f32 0.0, %v259
    %v261 = vpop.f32.mrb[0].mxu0
    %262 = vdwg.mxu0
    %v263 = vrot.slane %v260, 4
    %v264 = vadd.f32 %v260, %v263
    %v265 = vrot.slane %v264, 2
    %v266 = vadd.f32 %v264, %v265
    %v267 = vrot.slane %v266, 1
    %v268 = vadd.f32 %v266, %v267
    %v269 = vmul.f32 %v260, %v260
    %v270 = vrot.slane %v269, 4
    %v271 = vadd.f32 %v269, %v270
    %v272 = vrot.slane %v271, 2
    %v273 = vadd.f32 %v271, %v272
    %v274 = vrot.slane %v273, 1
    %v275 = vadd.f32 %v273, %v274
    %v276 = vmul.f32 %v268, 0.125
    %v277 = vmul.f32 %v275, 0.125
    %v278 = vmul.f32 %v276, %v276
    %v279 = vsub.f32 %v277, %v278
    %v280 = vadd.f32 %v279, 1e-05
    %v281 = vrsqrt.pop %v280
    %v282 = vmul.f32 %v53, %v281
    %v283 = vlaneseq
    %v284 = vshrl.u32 %v283, 7
    %v285 = vsub.s32 2, %v284
    %v286 = vrot.slane %v282, %v285
    %v287 = vmul.f32 %v260, %v286
    %v288 = vmul.f32 %v276, %v282
    %v290 = vrot.slane %v288, 7
    %v292 = vsub.f32 %v53, %v290
    %v293 = vlaneseq
    %v294 = vshrl.u32 %v293, 7
    %v295 = vsub.s32 3, %v294
    %v296 = vrot.slane %v292, %v295
    %v297 = vadd.f32 %v287, %v296
    %v298 = vmax.f32 %v297, 0.0
    %s299 = scalar_lea.vmem [#allocation5], 256
    %v300 = vld [vmem:[%s299] sm:$0xff]
    %v301 = vld [vmem:[%s299 + $0x8] sm:$0xff]
    %v302 = vld [vmem:[%s299 + $0x10] sm:$0xff]
    %v303 = vld [vmem:[%s299 + $0x18] sm:$0xff]
    %v304 = vld [vmem:[%s299 + $0x20] sm:$0xff]
    %v305 = vld [vmem:[%s299 + $0x28] sm:$0xff]
    %v306 = vld [vmem:[%s299 + $0x30] sm:$0xff]
    %v307 = vld [vmem:[%s299 + $0x38] sm:$0xff]
    %v308 = vld [vmem:[%s299 + $0x40] sm:$0xff]
    %v309 = vld [vmem:[%s299 + $0x48] sm:$0xff]
    %v310 = vld [vmem:[%s299 + $0x50] sm:$0xff]
    %v311 = vld [vmem:[%s299 + $0x58] sm:$0xff]
    %v312 = vld [vmem:[%s299 + $0x60] sm:$0xff]
    %v313 = vld [vmem:[%s299 + $0x68] sm:$0xff]
    %v314 = vld [vmem:[%s299 + $0x70] sm:$0xff]
    %v315 = vld [vmem:[%s299 + $0x78] sm:$0xff]
    %v316 = vlaneseq
    %v317 = vshrl.u32 %v316, 7
    %v318 = vsub.s32 4, %v317
    %v319 = vrot.slane %v53, %v318
    %320 = vmatprep.subr.mxu0 0.0
    %321 = vmatpush1.msra.mxu0 %v300
    %322 = vmatprep.subr.mxu0 0.0
    %323 = vmatpush1.msra.mxu0 %v301
    %324 = vmatprep.subr.mxu0 0.0
    %325 = vmatpush1.msra.mxu0 %v302
    %326 = vmatprep.subr.mxu0 0.0
    %327 = vmatpush1.msra.mxu0 %v303
    %328 = vmatprep.subr.mxu0 0.0
    %329 = vmatpush1.msra.mxu0 %v304
    %330 = vmatprep.subr.mxu0 0.0
    %331 = vmatpush1.msra.mxu0 %v305
    %332 = vmatprep.subr.mxu0 0.0
    %333 = vmatpush1.msra.mxu0 %v306
    %334 = vmatprep.subr.mxu0 0.0
    %335 = vmatpush1.msra.mxu0 %v307
    %336 = vmatprep.subr.mxu0 0.0
    %337 = vmatpush1.msra.mxu0 %v308
    %338 = vmatprep.subr.mxu0 0.0
    %339 = vmatpush1.msra.mxu0 %v309
    %340 = vmatprep.subr.mxu0 0.0
    %341 = vmatpush1.msra.mxu0 %v310
    %342 = vmatprep.subr.mxu0 0.0
    %343 = vmatpush1.msra.mxu0 %v311
    %344 = vmatprep.subr.mxu0 0.0
    %345 = vmatpush1.msra.mxu0 %v312
    %346 = vmatprep.subr.mxu0 0.0
    %347 = vmatpush1.msra.mxu0 %v313
    %348 = vmatprep.subr.mxu0 0.0
    %349 = vmatpush1.msra.mxu0 %v314
    %350 = vmatprep.subr.mxu0 0.0
    %351 = vmatpush1.msra.mxu0 %v315
    %352 = vmatprep.subr.mxu0 0.0
    %353 = vmatpush1.msra.mxu0 0.0
    %354 = vmatprep.subr.mxu0 0.0
    %355 = vmatpush1.msra.mxu0 0.0
    %356 = vmatprep.subr.mxu0 0.0
    %357 = vmatpush1.msra.mxu0 0.0
    %358 = vmatprep.subr.mxu0 0.0
    %359 = vmatpush1.msra.mxu0 0.0
    %360 = vmatprep.subr.mxu0 0.0
    %361 = vmatpush1.msra.mxu0 0.0
    %362 = vmatprep.subr.mxu0 0.0
    %363 = vmatpush1.msra.mxu0 0.0
    %364 = vmatprep.subr.mxu0 0.0
    %365 = vmatpush1.msra.mxu0 0.0
    %366 = vmatprep.subr.mxu0 0.0
    %367 = vmatpush1.msra.mxu0 0.0
    %368 = vmatprep.subr.mxu0 0.0
    %369 = vmatpush1.msra.mxu0 0.0
    %370 = vmatprep.subr.mxu0 0.0
    %371 = vmatpush1.msra.mxu0 0.0
    %372 = vmatprep.subr.mxu0 0.0
    %373 = vmatpush1.msra.mxu0 0.0
    %374 = vmatprep.subr.mxu0 0.0
    %375 = vmatpush1.msra.mxu0 0.0
    %376 = vmatprep.subr.mxu0 0.0
    %377 = vmatpush1.msra.mxu0 0.0
    %378 = vmatprep.subr.mxu0 0.0
    %379 = vmatpush1.msra.mxu0 0.0
    %380 = vmatprep.subr.mxu0 0.0
    %381 = vmatpush1.msra.mxu0 0.0
    %382 = vmatprep.subr.mxu0 0.0
    %383 = vmatpush1.msra.mxu0 0.0
    %384 = vmatprep.mubr.f32.mxu0 0.0
    %385 = vmatmul.mubr.f32.gmra.mrb[0].mxu0 %v298
    %v386 = vpop.f32.mrb[0].mxu0
    %v387 = vadd.f32 %v319, %v386
    %v388 = vpop.f32.mrb[0].mxu0
    %389 = vdwg.mxu0
    %390 = vst [vmem:[#allocation8] sm:$0xff] %v387
    // Predicated region
    $region26: #{tpu_custom_call.1} parent=1 // pred_check
      _
    $region27: #{tpu_custom_call.1} parent=1 // pred_check_branch
      %392 = sbr.rel (0) target = $region29
    $region28: #{tpu_custom_call.1} parent=1 // pred_region
      %s394 = ssub.s32 128, 128
      %395 = vsyncadd [#allocation4], %s394
      %s397 = sshll.u32 [#allocation8], 4
      %s398 = int_to_ptr.vmem [resolvable:$true] %s397
      %400 = dma.vmem_to_hbm [thread:$0]  %s398, 128, %s3, [#allocation4]
    $region29: #{tpu_custom_call.1} parent=1 // pred_fallthru
      _
    // Predicated region
    $region30: #{tpu_custom_call.1} parent=1 // pred_check
      _
    $region31: #{tpu_custom_call.1} parent=1 // pred_check_branch
      %402 = sbr.rel (0) target = $region33
    $region32: #{tpu_custom_call.1} parent=1 // pred_region
      %403 = dma.done [#allocation4], 128
    $region33: #{tpu_custom_call.1} parent=1 // pred_fallthru
      _
    %404 = vsyncpa [#allocation3], 1
    %405 = vsyncpa [#allocation6], 1
    %406 = vsyncpa [#allocation4], 1

</llo_original>
